<compile_context>
chip_gen: v6e
topology: v6e:2x2x1
jax: 0.10.0
libtpu: 0.0.40
codegen_flags: <defaults>
</compile_context>

<pallas_src>
import functools

import jax
import jax.numpy as jnp
from jax.experimental import pallas as pl
from jax.experimental.pallas import tpu as pltpu

_LANE = 128
_TP_CAP = 32768        # lane cap per tile (HBM roofline is reached well before this)
_TB_CAP = 8            # batch rows packed per grid step (amortizes per-step overhead)
_MIN_STEPS = 4         # keep enough grid steps for megacore / pipeline steady state
_MIB = 1024 * 1024


def _vmem_capacity_bytes():
    try:
        return int(pltpu.get_tpu_info().vmem_capacity_bytes)
    except Exception:
        return 64 * _MIB          # conservative fallback (v7x physical VMEM)


def _choose_tiling(B, L, K, P, itemsize, tile_budget):
    """Pick (TB, TP) so the double-buffered in+out tiles fit in `tile_budget` bytes."""
    # bytes per (batch-row x lane-column): double-buffered x + out tiles, plus
    # slack for the f32 accumulators the matmul materializes before the cast.
    per_col = 2 * (L + K) * itemsize + 2 * K * 4
    max_cols = max(_LANE, tile_budget // per_col)            # budget for TB * TP

    tp_full = pl.cdiv(P, _LANE) * _LANE
    tp = max(_LANE, min(tp_full, (max_cols // _LANE) * _LANE, _TP_CAP))
    tb = int(min(B, _TB_CAP, max(1, max_cols // tp)))

    # Keep >= _MIN_STEPS grid steps when the workload is big enough that
    # splitting does not push us back into the per-step-overhead regime.
    min_cols_per_step = max(_LANE, (256 * 1024) // ((L + K) * itemsize))

    def n_steps(tb_, tp_):
        return pl.cdiv(B, tb_) * pl.cdiv(P, tp_)

    while tb > 1 and n_steps(tb, tp) < _MIN_STEPS and (tb - 1) * tp >= min_cols_per_step:
        tb -= 1
    while n_steps(tb, tp) < _MIN_STEPS:
        new_tp = max(_LANE, ((tp // 2) // _LANE) * _LANE)
        if new_tp == tp or tb * new_tp < min_cols_per_step:
            break
        tp = new_tp
    return tb, tp


def _sample_kernel(mask_t_ref, x_ref, o_ref, *, alpha):
    # mask_t_ref: [K, L] raw parameter (transposed); x_ref: [TB, L, TP]; o_ref: [TB, K, TP]
    m = mask_t_ref[...].astype(jnp.float32) * alpha
    m = m - jnp.max(m, axis=1, keepdims=True)            # stable softmax over lights (L)
    e = jnp.exp(m)
    w_t = (e / jnp.sum(e, axis=1, keepdims=True)).astype(x_ref.dtype)   # [K, L]
    for b in range(x_ref.shape[0]):                      # short unrolled batch sub-block
        acc = jnp.dot(w_t, x_ref[b], preferred_element_type=jnp.float32)  # [K, TP] in f32
        o_ref[b] = acc.astype(o_ref.dtype)


def sample_net_forward(mask, inps, alpha=8.0):
    """mask: [num_lights, num_samples] raw parameter (softmax applied in-kernel).
    inps: [B, num_lights, C, H, W] (generally [B, L, *rest], len(rest) >= 1).
    Returns [B, num_samples * C, H, W] exactly like SampleNet.forward (same dtype as inps)."""
    B, L = inps.shape[0], inps.shape[1]
    rest = inps.shape[2:]
    K = mask.shape[1]
    P = 1
    for r in rest:
        P *= r

    x = inps.reshape(B, L, P)                            # free reshape (no transpose, no pad)
    itemsize = x.dtype.itemsize

    vmem_cap = _vmem_capacity_bytes()
    tile_budget = min(vmem_cap // 3, 48 * _MIB)          # ~21 MiB on v7x, ~42 MiB on v5e/v6e
    vmem_limit = int(min(vmem_cap * 3 // 4, 2 * tile_budget))
    tb, tp = _choose_tiling(B, L, K, P, itemsize, tile_budget)

    grid = (pl.cdiv(B, tb), pl.cdiv(P, tp))
    n_step = grid[0] * grid[1]
    cost = pl.CostEstimate(
        flops=2 * B * K * L * P,
        transcendentals=K * L * n_step,
        bytes_accessed=itemsize * (B * L * P + B * K * P) + mask.dtype.itemsize * K * L,
    )

    mask_t = jnp.transpose(mask)                         # tiny [K, L]; keeps kernel transpose-free

    out = pl.pallas_call(
        functools.partial(_sample_kernel, alpha=float(alpha)),
        out_shape=jax.ShapeDtypeStruct((B, K, P), x.dtype),
        grid=grid,
        in_specs=[
            pl.BlockSpec((K, L), lambda b, p: (0, 0)),           # resident weights
            pl.BlockSpec((tb, L, tp), lambda b, p: (b, 0, p)),
        ],
        out_specs=pl.BlockSpec((tb, K, tp), lambda b, p: (b, 0, p)),
        compiler_params=pltpu.CompilerParams(
            dimension_semantics=("parallel", "parallel"),
            vmem_limit_bytes=vmem_limit,
        ),
        cost_estimate=cost,
    )(mask_t, x)

    out = out.reshape(B, K, *rest)                       # [B, K, C, H, W]
    return out.reshape(B, K * rest[0], *rest[1:])        # [B, K*C, H, W]


def _reference(mask, inps, alpha):
    """Pure-JAX reference of the PyTorch forward (f32 math)."""
    B = inps.shape[0]
    K = mask.shape[1]
    rest = inps.shape[2:]
    w = jax.nn.softmax(mask.astype(jnp.float32) * alpha, axis=0)
    out = jnp.einsum('lk,blchw->bkchw', w, inps.astype(jnp.float32))
    return out.reshape(B, K * rest[0], *rest[1:])


if __name__ == "__main__":
    key = jax.random.PRNGKey(0)
    k_mask, k_x1, k_x2 = jax.random.split(key, 3)

    num_lights, num_samples = 16, 8
    alpha = 8.0
    mask = jax.random.normal(k_mask, (num_lights, num_samples), jnp.float32)

    # 1) f32, lane-aligned P (C*H*W = 5*16*16 = 1280)
    B, C, H, W = 2, 5, 16, 16
    x1 = jax.random.normal(k_x1, (B, num_lights, C, H, W), jnp.float32)
    out1 = jax.block_until_ready(sample_net_forward(mask, x1, alpha))
    ref1 = _reference(mask, x1, alpha)
    assert out1.shape == (B, num_samples * C, H, W), out1.shape
    assert out1.dtype == x1.dtype, out1.dtype
    assert bool(jnp.allclose(out1, ref1, rtol=1e-5, atol=1e-5)), float(jnp.max(jnp.abs(out1 - ref1)))

    # 2) f32, ragged P (C*H*W = 5*15*15 = 1125, not a multiple of 128): exercises the
    #    no-pad / no-slice path where OOB lanes of the last block are dropped.
    B2, C2, H2, W2 = 3, 5, 15, 15
    x2 = jax.random.normal(k_x2, (B2, num_lights, C2, H2, W2), jnp.float32)
    out2 = jax.block_until_ready(sample_net_forward(mask, x2, alpha))
    ref2 = _reference(mask, x2, alpha)
    assert out2.shape == (B2, num_samples * C2, H2, W2), out2.shape
    assert bool(jnp.allclose(out2, ref2, rtol=1e-5, atol=1e-5)), float(jnp.max(jnp.abs(out2 - ref2)))

    # 3) bf16 inputs -> bf16 output (f32 accumulation inside the kernel).
    x3 = x1.astype(jnp.bfloat16)
    out3 = jax.block_until_ready(sample_net_forward(mask, x3, alpha))
    ref3 = _reference(mask, x3, alpha)
    assert out3.dtype == jnp.bfloat16, out3.dtype
    assert bool(jnp.allclose(out3.astype(jnp.float32), ref3, rtol=5e-2, atol=5e-2))

    print("KERNEL_OK")
</pallas_src>

<mosaic_0001>
module attributes {stable_mosaic.version = 11 : i64} {
  func.func @_sample_kernel(%arg0: i32, %arg1: i32, %arg2: memref<8x16xf32, #tpu.memory_space<vmem>>, %arg3: memref<2x16x1280xf32, #tpu.memory_space<vmem>>, %arg4: memref<2x8x1280xf32, #tpu.memory_space<vmem>>) attributes {dimension_semantics = [#tpu.dimension_semantics<parallel>, #tpu.dimension_semantics<parallel>], iteration_bounds = array<i64: 1, 1>, scalar_prefetch = 0 : i64, scratch_operands = 0 : i64, tpu.core_type = #tpu.core_type<tc>, window_params = [{pipeline_mode = #tpu.pipeline_mode<synchronous>, transform_indices = @transform_0, window_bounds = array<i64: 8, 16>}, {transform_indices = @transform_1, window_bounds = array<i64: 2, 16, 1280>}, {transform_indices = @transform_2, window_bounds = array<i64: 2, 8, 1280>}]} {
    %c0 = arith.constant 0 : index
    %c0_0 = arith.constant 0 : index
    %0 = vector.load %arg2[%c0, %c0_0] : memref<8x16xf32, #tpu.memory_space<vmem>>, vector<8x16xf32>
    %cst = arith.constant 8.000000e+00 : f32
    %1 = vector.broadcast %cst : f32 to vector<8x16xf32>
    %2 = arith.mulf %0, %1 : vector<8x16xf32>
    %cst_1 = arith.constant dense<0xFF800000> : vector<8xf32>
    %3 = vector.multi_reduction <maximumf>, %2, %cst_1 [1] : vector<8x16xf32> to vector<8xf32>
    %4 = vector.shape_cast %3 : vector<8xf32> to vector<8x1xf32>
    %5 = vector.broadcast %4 : vector<8x1xf32> to vector<8x16xf32>
    %6 = arith.subf %2, %5 : vector<8x16xf32>
    %7 = math.exp %6 : vector<8x16xf32>
    %cst_2 = arith.constant dense<0.000000e+00> : vector<8xf32>
    %8 = vector.multi_reduction <add>, %7, %cst_2 [1] : vector<8x16xf32> to vector<8xf32>
    %9 = vector.shape_cast %8 : vector<8xf32> to vector<8x1xf32>
    %10 = vector.broadcast %9 : vector<8x1xf32> to vector<8x16xf32>
    %11 = arith.divf %7, %10 : vector<8x16xf32>
    %c0_3 = arith.constant 0 : index
    %c0_4 = arith.constant 0 : index
    %c0_5 = arith.constant 0 : index
    %12 = vector.load %arg3[%c0_3, %c0_4, %c0_5] : memref<2x16x1280xf32, #tpu.memory_space<vmem>>, vector<1x16x1280xf32>
    %13 = vector.shape_cast %12 : vector<1x16x1280xf32> to vector<16x1280xf32>
    %cst_6 = arith.constant dense<0.000000e+00> : vector<8x1280xf32>
    %14 = tpu.matmul %11, %13, %cst_6 {dimension_numbers = #tpu.dot_dimension_numbers<[1], [0], [0], [1], [0, 0, 1, 1], [], []>} : vector<8x16xf32>, vector<16x1280xf32>, vector<8x1280xf32> -> vector<8x1280xf32>
    %c0_7 = arith.constant 0 : index
    %c0_8 = arith.constant 0 : index
    %c0_9 = arith.constant 0 : index
    %15 = vector.load %arg4[%c0_7, %c0_8, %c0_9] : memref<2x8x1280xf32, #tpu.memory_space<vmem>>, vector<1x8x1280xf32>
    %16 = vector.shape_cast %15 : vector<1x8x1280xf32> to vector<8x1280xf32>
    %17 = vector.shape_cast %14 : vector<8x1280xf32> to vector<1x8x1280xf32>
    tpu.vector_store %arg4[%c0_7, %c0_8, %c0_9], %17 {strides = array<i32>} : memref<2x8x1280xf32, #tpu.memory_space<vmem>>, vector<1x8x1280xf32>,
    %c1 = arith.constant 1 : index
    %c0_10 = arith.constant 0 : index
    %c0_11 = arith.constant 0 : index
    %18 = vector.load %arg3[%c1, %c0_10, %c0_11] : memref<2x16x1280xf32, #tpu.memory_space<vmem>>, vector<1x16x1280xf32>
    %19 = vector.shape_cast %18 : vector<1x16x1280xf32> to vector<16x1280xf32>
    %cst_12 = arith.constant dense<0.000000e+00> : vector<8x1280xf32>
    %20 = tpu.matmul %11, %19, %cst_12 {dimension_numbers = #tpu.dot_dimension_numbers<[1], [0], [0], [1], [0, 0, 1, 1], [], []>} : vector<8x16xf32>, vector<16x1280xf32>, vector<8x1280xf32> -> vector<8x1280xf32>
    %c1_13 = arith.constant 1 : index
    %c0_14 = arith.constant 0 : index
    %c0_15 = arith.constant 0 : index
    %21 = vector.load %arg4[%c1_13, %c0_14, %c0_15] : memref<2x8x1280xf32, #tpu.memory_space<vmem>>, vector<1x8x1280xf32>
    %22 = vector.shape_cast %21 : vector<1x8x1280xf32> to vector<8x1280xf32>
    %23 = vector.shape_cast %20 : vector<8x1280xf32> to vector<1x8x1280xf32>
    tpu.vector_store %arg4[%c1_13, %c0_14, %c0_15], %23 {strides = array<i32>} : memref<2x8x1280xf32, #tpu.memory_space<vmem>>, vector<1x8x1280xf32>,
    return
  }
  func.func @transform_0(%arg0: i32, %arg1: i32) -> (i32, i32) {
    %c0_i32 = arith.constant 0 : i32
    %c0_i32_0 = arith.constant 0 : i32
    %c0_i32_1 = arith.constant 0 : i32
    return %c0_i32, %c0_i32_0 : i32, i32
  }
  func.func @transform_1(%arg0: i32, %arg1: i32) -> (i32, i32, i32) {
    %c0_i32 = arith.constant 0 : i32
    %c0_i32_0 = arith.constant 0 : i32
    return %arg0, %c0_i32, %arg1 : i32, i32, i32
  }
  func.func @transform_2(%arg0: i32, %arg1: i32) -> (i32, i32, i32) {
    %c0_i32 = arith.constant 0 : i32
    %c0_i32_0 = arith.constant 0 : i32
    return %arg0, %c0_i32, %arg1 : i32, i32, i32
  }
}

</mosaic_0001>

<llo_original>
// kernel: tpu_custom_call.1
$region0: #{tpu_custom_call.1}
  #allocation0 [shape = 'u32[]', space=smem, size = 0x4, offset = 0x4, fixed_abs, tag = 'smem constant byte address 0x4 - core index']
  #allocation1 [shape = 'u32[144,128]{1,0:T(1,128)}', space=vmem, size = 0x12000, scoped, tag = 'internal scratch']
  %s0 = inlined_call_operand.hbm [shape: f32[8,16], index: 0, kind: input, shape index: {}]
  %s1 = inlined_call_operand.hbm [shape: f32[2,16,1280], index: 1, kind: input, shape index: {}]
  %s2 = inlined_call_operand.hbm [shape: f32[2,8,1280], index: 2, kind: output, shape index: {}]
  %s3 = sld [smem:[#allocation0]]
  $region26: #{tpu_custom_call.1} parent=0
    _
  %s5 = ssub.s32 1, %s3
  %s6 = scalar_select 0, %s5, %s3
  $region1: #{tpu_custom_call.1} parent=0
    #allocation2 [shape = 'u8[4096]{0}', space=vmem, size = 0x1000, scoped, tag = 'input window, operand 0, single buffered']
    #allocation3 [shape = 's32[1]{0}', space=sflag, size = 0x4, scoped, tag = 'scoped memory for tpu_custom_call.1']
    #allocation4 [shape = 's32[1]{0}', space=sflag, size = 0x4, scoped, tag = 'scoped memory for tpu_custom_call.1']
    #allocation5 [shape = 'u8[163840]{0}', space=vmem, size = 0x28000, scoped, tag = 'input window, operand 1, single buffered']
    #allocation6 [shape = 's32[1]{0}', space=sflag, size = 0x4, scoped, tag = 'scoped memory for tpu_custom_call.1']
    #allocation7 [shape = 'u8[81920]{0}', space=vmem, size = 0x14000, scoped, tag = 'output window, operand 0, single buffered']
    %7 = vsyncpa [#allocation3], 0
    %8 = vsyncpa [#allocation6], 0
    %9 = vsyncpa [#allocation4], 0
    // Predicated region
    $region2: #{tpu_custom_call.1} parent=1 // pred_check
      _
    $region3: #{tpu_custom_call.1} parent=1 // pred_check_branch
      %11 = sbr.rel (0) target = $region5
    $region4: #{tpu_custom_call.1} parent=1 // pred_region
      %s13 = ssub.s32 128, 128
      %14 = vsyncadd [#allocation3], %s13
      %s16 = sshll.u32 [#allocation2], 4
      %s17 = int_to_ptr.vmem [resolvable:$true] %s16
      %19 = dma.hbm_to_vmem [thread:$0]  %s0, 128, %s17, [#allocation3]
    $region5: #{tpu_custom_call.1} parent=1 // pred_fallthru
      _
    // Predicated region
    $region6: #{tpu_custom_call.1} parent=1 // pred_check
      _
    $region7: #{tpu_custom_call.1} parent=1 // pred_check_branch
      %21 = sbr.rel (0) target = $region9
    $region8: #{tpu_custom_call.1} parent=1 // pred_region
      %s23 = ssub.s32 5120, 5120
      %24 = vsyncadd [#allocation6], %s23
      %s25 = sshll.u32 [#allocation5], 4
      %s26 = int_to_ptr.vmem [resolvable:$true] %s25
      %31 = dma.hbm_to_vmem [thread:$0]  %s1, 5120, %s26, [#allocation6], 1280, 1280, 80
    $region9: #{tpu_custom_call.1} parent=1 // pred_fallthru
      _
    // Predicated region
    $region10: #{tpu_custom_call.1} parent=1 // pred_check
      _
    $region11: #{tpu_custom_call.1} parent=1 // pred_check_branch
      %33 = sbr.rel (0) target = $region13
    $region12: #{tpu_custom_call.1} parent=1 // pred_region
      %34 = dma.done [#allocation3], 128
    $region13: #{tpu_custom_call.1} parent=1 // pred_fallthru
      _
    // Predicated region
    $region14: #{tpu_custom_call.1} parent=1 // pred_check
      _
    $region15: #{tpu_custom_call.1} parent=1 // pred_check_branch
      %36 = sbr.rel (0) target = $region17
    $region16: #{tpu_custom_call.1} parent=1 // pred_region
      %37 = dma.done [#allocation6], 5120
    $region17: #{tpu_custom_call.1} parent=1 // pred_fallthru
      _
    %v38 = vld [vmem:[#allocation2] sm:$0xff]
    %v39 = vmul.f32 %v38, 8.0
    %vm40 = vcmask 130048
    %v41 = vsel %vm40, %v39, -inf
    %42 = vmax.xlane.f32.xlu0 %v41
    %v43 = vpop.xlane.xlu0 %42
    %v44 = vsub.f32 %v39, %v43
    %v45 = vmul.f32 %v44, 1.442695
    %v46 = vpow.pop %v45
    %v47 = vsel %vm40, %v46, 0.0
    %48 = vadd.xlane.f32.xlu0 %v47
    %v49 = vpop.xlane.xlu0 %48
    %v50 = vrcp.pop %v49
    %v51 = vmul.f32 %v46, %v50
    %v52 = vld [vmem:[#allocation5] sm:$0xff]
    %v53 = vld [vmem:[#allocation5 + $0x8] sm:$0xff]
    %v54 = vld [vmem:[#allocation5 + $0x10] sm:$0xff]
    %v55 = vld [vmem:[#allocation5 + $0x18] sm:$0xff]
    %v56 = vld [vmem:[#allocation5 + $0x20] sm:$0xff]
    %v57 = vld [vmem:[#allocation5 + $0x28] sm:$0xff]
    %v58 = vld [vmem:[#allocation5 + $0x30] sm:$0xff]
    %v59 = vld [vmem:[#allocation5 + $0x38] sm:$0xff]
    %v60 = vld [vmem:[#allocation5 + $0x40] sm:$0xff]
    %v61 = vld [vmem:[#allocation5 + $0x48] sm:$0xff]
    %v62 = vld [vmem:[#allocation5 + $0x50] sm:$0xff]
    %v63 = vld [vmem:[#allocation5 + $0x58] sm:$0xff]
    %v64 = vld [vmem:[#allocation5 + $0x60] sm:$0xff]
    %v65 = vld [vmem:[#allocation5 + $0x68] sm:$0xff]
    %v66 = vld [vmem:[#allocation5 + $0x70] sm:$0xff]
    %v67 = vld [vmem:[#allocation5 + $0x78] sm:$0xff]
    %v68 = vld [vmem:[#allocation5 + $0x80] sm:$0xff]
    %v69 = vld [vmem:[#allocation5 + $0x88] sm:$0xff]
    %v70 = vld [vmem:[#allocation5 + $0x90] sm:$0xff]
    %v71 = vld [vmem:[#allocation5 + $0x98] sm:$0xff]
    %v73 = vsel %vm40, %v51, 0
    %75 = vmatprep.subr.mxu0 0.0
    %76 = vmatpush1.msra.mxu0 0.0
    %77 = vmatprep.subr.mxu0 0.0
    %78 = vmatpush1.msra.mxu0 0.0
    %79 = vmatprep.subr.mxu0 0.0
    %80 = vmatpush1.msra.mxu0 0.0
    %81 = vmatprep.subr.mxu0 0.0
    %82 = vmatpush1.msra.mxu0 0.0
    %83 = vmatprep.subr.mxu0 0.0
    %84 = vmatpush1.msra.mxu0 0.0
    %85 = vmatprep.subr.mxu0 0.0
    %86 = vmatpush1.msra.mxu0 0.0
    %87 = vmatprep.subr.mxu0 0.0
    %88 = vmatpush1.msra.mxu0 0.0
    %89 = vmatprep.subr.mxu0 0.0
    %90 = vmatpush1.msra.mxu0 0.0
    %91 = vmatprep.subr.mxu0 0.0
    %92 = vmatpush1.msra.mxu0 0.0
    %93 = vmatprep.subr.mxu0 0.0
    %94 = vmatpush1.msra.mxu0 0.0
    %95 = vmatprep.subr.mxu0 0.0
    %96 = vmatpush1.msra.mxu0 0.0
    %97 = vmatprep.subr.mxu0 0.0
    %98 = vmatpush1.msra.mxu0 0.0
    %99 = vmatprep.subr.mxu0 0.0
    %100 = vmatpush1.msra.mxu0 0.0
    %101 = vmatprep.subr.mxu0 0.0
    %102 = vmatpush1.msra.mxu0 0.0
    %103 = vmatprep.subr.mxu0 %v63
    %104 = vmatpush1.msra.mxu0 %v62
    %105 = vmatprep.subr.mxu0 %v53
    %106 = vmatpush1.msra.mxu0 %v52
    %107 = vmatprep.subr.mxu0 0.0
    %108 = vmatpush2.msra.mxu0 0.0
    %109 = vmatprep.subr.mxu0 0.0
    %110 = vmatpush2.msra.mxu0 0.0
    %111 = vmatprep.subr.mxu0 0.0
    %112 = vmatpush2.msra.mxu0 0.0
    %113 = vmatprep.subr.mxu0 0.0
    %114 = vmatpush2.msra.mxu0 0.0
    %115 = vmatprep.subr.mxu0 0.0
    %116 = vmatpush2.msra.mxu0 0.0
    %117 = vmatprep.subr.mxu0 0.0
    %118 = vmatpush2.msra.mxu0 0.0
    %119 = vmatprep.subr.mxu0 0.0
    %120 = vmatpush2.msra.mxu0 0.0
    %121 = vmatprep.subr.mxu0 0.0
    %122 = vmatpush2.msra.mxu0 0.0
    %123 = vmatprep.subr.mxu0 0.0
    %124 = vmatpush2.msra.mxu0 0.0
    %125 = vmatprep.subr.mxu0 0.0
    %126 = vmatpush2.msra.mxu0 0.0
    %127 = vmatprep.subr.mxu0 0.0
    %128 = vmatpush2.msra.mxu0 0.0
    %129 = vmatprep.subr.mxu0 0.0
    %130 = vmatpush2.msra.mxu0 0.0
    %131 = vmatprep.subr.mxu0 0.0
    %132 = vmatpush2.msra.mxu0 0.0
    %133 = vmatprep.subr.mxu0 0.0
    %134 = vmatpush2.msra.mxu0 0.0
    %135 = vmatprep.subr.mxu0 0.0
    %136 = vmatpush2.msra.mxu0 0.0
    %137 = vmatprep.subr.mxu0 0.0
    %138 = vmatpush2.msra.mxu0 0.0
    %139 = vmatprep.mubr.f32.mxu0 0.0
    %140 = vmatmul.mubr.f32.gmra.mxu0 %v73
    %v141 = vpop.f32.mrf.mxu0
    %v142 = vadd.f32 0.0, %v141
    %v143 = vpop.f32.mrf.mxu0
    %v144 = vadd.f32 0.0, %v143
    %145 = vdwg.mxu0
    %146 = vmatprep.subr.mxu0 0.0
    %147 = vmatpush1.msra.mxu0 0.0
    %148 = vmatprep.subr.mxu0 0.0
    %149 = vmatpush1.msra.mxu0 0.0
    %150 = vmatprep.subr.mxu0 0.0
    %151 = vmatpush1.msra.mxu0 0.0
    %152 = vmatprep.subr.mxu0 0.0
    %153 = vmatpush1.msra.mxu0 0.0
    %154 = vmatprep.subr.mxu0 0.0
    %155 = vmatpush1.msra.mxu0 0.0
    %156 = vmatprep.subr.mxu0 0.0
    %157 = vmatpush1.msra.mxu0 0.0
    %158 = vmatprep.subr.mxu0 0.0
    %159 = vmatpush1.msra.mxu0 0.0
    %160 = vmatprep.subr.mxu0 0.0
    %161 = vmatpush1.msra.mxu0 0.0
    %162 = vmatprep.subr.mxu0 0.0
    %163 = vmatpush1.msra.mxu0 0.0
    %164 = vmatprep.subr.mxu0 0.0
    %165 = vmatpush1.msra.mxu0 0.0
    %166 = vmatprep.subr.mxu0 0.0
    %167 = vmatpush1.msra.mxu0 0.0
    %168 = vmatprep.subr.mxu0 0.0
    %169 = vmatpush1.msra.mxu0 0.0
    %170 = vmatprep.subr.mxu0 0.0
    %171 = vmatpush1.msra.mxu0 0.0
    %172 = vmatprep.subr.mxu0 0.0
    %173 = vmatpush1.msra.mxu0 0.0
    %174 = vmatprep.subr.mxu0 %v65
    %175 = vmatpush1.msra.mxu0 %v64
    %176 = vmatprep.subr.mxu0 %v55
    %177 = vmatpush1.msra.mxu0 %v54
    %178 = vmatprep.subr.mxu0 0.0
    %179 = vmatpush2.msra.mxu0 0.0
    %180 = vmatprep.subr.mxu0 0.0
    %181 = vmatpush2.msra.mxu0 0.0
    %182 = vmatprep.subr.mxu0 0.0
    %183 = vmatpush2.msra.mxu0 0.0
    %184 = vmatprep.subr.mxu0 0.0
    %185 = vmatpush2.msra.mxu0 0.0
    %186 = vmatprep.subr.mxu0 0.0
    %187 = vmatpush2.msra.mxu0 0.0
    %188 = vmatprep.subr.mxu0 0.0
    %189 = vmatpush2.msra.mxu0 0.0
    %190 = vmatprep.subr.mxu0 0.0
    %191 = vmatpush2.msra.mxu0 0.0
    %192 = vmatprep.subr.mxu0 0.0
    %193 = vmatpush2.msra.mxu0 0.0
    %194 = vmatprep.subr.mxu0 0.0
    %195 = vmatpush2.msra.mxu0 0.0
    %196 = vmatprep.subr.mxu0 0.0
    %197 = vmatpush2.msra.mxu0 0.0
    %198 = vmatprep.subr.mxu0 0.0
    %199 = vmatpush2.msra.mxu0 0.0
    %200 = vmatprep.subr.mxu0 0.0
    %201 = vmatpush2.msra.mxu0 0.0
    %202 = vmatprep.subr.mxu0 0.0
    %203 = vmatpush2.msra.mxu0 0.0
    %204 = vmatprep.subr.mxu0 0.0
    %205 = vmatpush2.msra.mxu0 0.0
    %206 = vmatprep.subr.mxu0 0.0
    %207 = vmatpush2.msra.mxu0 0.0
    %208 = vmatprep.subr.mxu0 0.0
    %209 = vmatpush2.msra.mxu0 0.0
    %210 = vmatprep.mubr.f32.mxu0 0.0
    %211 = vmatmul.mubr.f32.gmra.mxu0 %v73
    %v212 = vpop.f32.mrf.mxu0
    %v213 = vadd.f32 0.0, %v212
    %v214 = vpop.f32.mrf.mxu0
    %v215 = vadd.f32 0.0, %v214
    %216 = vdwg.mxu0
    %217 = vmatprep.subr.mxu0 0.0
    %218 = vmatpush1.msra.mxu0 0.0
    %219 = vmatprep.subr.mxu0 0.0
    %220 = vmatpush1.msra.mxu0 0.0
    %221 = vmatprep.subr.mxu0 0.0
    %222 = vmatpush1.msra.mxu0 0.0
    %223 = vmatprep.subr.mxu0 0.0
    %224 = vmatpush1.msra.mxu0 0.0
    %225 = vmatprep.subr.mxu0 0.0
    %226 = vmatpush1.msra.mxu0 0.0
    %227 = vmatprep.subr.mxu0 0.0
    %228 = vmatpush1.msra.mxu0 0.0
    %229 = vmatprep.subr.mxu0 0.0
    %230 = vmatpush1.msra.mxu0 0.0
    %231 = vmatprep.subr.mxu0 0.0
    %232 = vmatpush1.msra.mxu0 0.0
    %233 = vmatprep.subr.mxu0 0.0
    %234 = vmatpush1.msra.mxu0 0.0
    %235 = vmatprep.subr.mxu0 0.0
    %236 = vmatpush1.msra.mxu0 0.0
    %237 = vmatprep.subr.mxu0 0.0
    %238 = vmatpush1.msra.mxu0 0.0
    %239 = vmatprep.subr.mxu0 0.0
    %240 = vmatpush1.msra.mxu0 0.0
    %241 = vmatprep.subr.mxu0 0.0
    %242 = vmatpush1.msra.mxu0 0.0
    %243 = vmatprep.subr.mxu0 0.0
    %244 = vmatpush1.msra.mxu0 0.0
    %245 = vmatprep.subr.mxu0 %v67
    %246 = vmatpush1.msra.mxu0 %v66
    %247 = vmatprep.subr.mxu0 %v57
    %248 = vmatpush1.msra.mxu0 %v56
    %249 = vmatprep.subr.mxu0 0.0
    %250 = vmatpush2.msra.mxu0 0.0
    %251 = vmatprep.subr.mxu0 0.0
    %252 = vmatpush2.msra.mxu0 0.0
    %253 = vmatprep.subr.mxu0 0.0
    %254 = vmatpush2.msra.mxu0 0.0
    %255 = vmatprep.subr.mxu0 0.0
    %256 = vmatpush2.msra.mxu0 0.0
    %257 = vmatprep.subr.mxu0 0.0
    %258 = vmatpush2.msra.mxu0 0.0
    %259 = vmatprep.subr.mxu0 0.0
    %260 = vmatpush2.msra.mxu0 0.0
    %261 = vmatprep.subr.mxu0 0.0
    %262 = vmatpush2.msra.mxu0 0.0
    %263 = vmatprep.subr.mxu0 0.0
    %264 = vmatpush2.msra.mxu0 0.0
    %265 = vmatprep.subr.mxu0 0.0
    %266 = vmatpush2.msra.mxu0 0.0
    %267 = vmatprep.subr.mxu0 0.0
    %268 = vmatpush2.msra.mxu0 0.0
    %269 = vmatprep.subr.mxu0 0.0
    %270 = vmatpush2.msra.mxu0 0.0
    %271 = vmatprep.subr.mxu0 0.0
    %272 = vmatpush2.msra.mxu0 0.0
    %273 = vmatprep.subr.mxu0 0.0
    %274 = vmatpush2.msra.mxu0 0.0
    %275 = vmatprep.subr.mxu0 0.0
    %276 = vmatpush2.msra.mxu0 0.0
    %277 = vmatprep.subr.mxu0 0.0
    %278 = vmatpush2.msra.mxu0 0.0
    %279 = vmatprep.subr.mxu0 0.0
    %280 = vmatpush2.msra.mxu0 0.0
    %281 = vmatprep.mubr.f32.mxu0 0.0
    %282 = vmatmul.mubr.f32.gmra.mxu0 %v73
    %v283 = vpop.f32.mrf.mxu0
    %v284 = vadd.f32 0.0, %v283
    %v285 = vpop.f32.mrf.mxu0
    %v286 = vadd.f32 0.0, %v285
    %287 = vdwg.mxu0
    %288 = vmatprep.subr.mxu0 0.0
    %289 = vmatpush1.msra.mxu0 0.0
    %290 = vmatprep.subr.mxu0 0.0
    %291 = vmatpush1.msra.mxu0 0.0
    %292 = vmatprep.subr.mxu0 0.0
    %293 = vmatpush1.msra.mxu0 0.0
    %294 = vmatprep.subr.mxu0 0.0
    %295 = vmatpush1.msra.mxu0 0.0
    %296 = vmatprep.subr.mxu0 0.0
    %297 = vmatpush1.msra.mxu0 0.0
    %298 = vmatprep.subr.mxu0 0.0
    %299 = vmatpush1.msra.mxu0 0.0
    %300 = vmatprep.subr.mxu0 0.0
    %301 = vmatpush1.msra.mxu0 0.0
    %302 = vmatprep.subr.mxu0 0.0
    %303 = vmatpush1.msra.mxu0 0.0
    %304 = vmatprep.subr.mxu0 0.0
    %305 = vmatpush1.msra.mxu0 0.0
    %306 = vmatprep.subr.mxu0 0.0
    %307 = vmatpush1.msra.mxu0 0.0
    %308 = vmatprep.subr.mxu0 0.0
    %309 = vmatpush1.msra.mxu0 0.0
    %310 = vmatprep.subr.mxu0 0.0
    %311 = vmatpush1.msra.mxu0 0.0
    %312 = vmatprep.subr.mxu0 0.0
    %313 = vmatpush1.msra.mxu0 0.0
    %314 = vmatprep.subr.mxu0 0.0
    %315 = vmatpush1.msra.mxu0 0.0
    %316 = vmatprep.subr.mxu0 %v69
    %317 = vmatpush1.msra.mxu0 %v68
    %318 = vmatprep.subr.mxu0 %v59
    %319 = vmatpush1.msra.mxu0 %v58
    %320 = vmatprep.subr.mxu0 0.0
    %321 = vmatpush2.msra.mxu0 0.0
    %322 = vmatprep.subr.mxu0 0.0
    %323 = vmatpush2.msra.mxu0 0.0
    %324 = vmatprep.subr.mxu0 0.0
    %325 = vmatpush2.msra.mxu0 0.0
    %326 = vmatprep.subr.mxu0 0.0
    %327 = vmatpush2.msra.mxu0 0.0
    %328 = vmatprep.subr.mxu0 0.0
    %329 = vmatpush2.msra.mxu0 0.0
    %330 = vmatprep.subr.mxu0 0.0
    %331 = vmatpush2.msra.mxu0 0.0
    %332 = vmatprep.subr.mxu0 0.0
    %333 = vmatpush2.msra.mxu0 0.0
    %334 = vmatprep.subr.mxu0 0.0
    %335 = vmatpush2.msra.mxu0 0.0
    %336 = vmatprep.subr.mxu0 0.0
    %337 = vmatpush2.msra.mxu0 0.0
    %338 = vmatprep.subr.mxu0 0.0
    %339 = vmatpush2.msra.mxu0 0.0
    %340 = vmatprep.subr.mxu0 0.0
    %341 = vmatpush2.msra.mxu0 0.0
    %342 = vmatprep.subr.mxu0 0.0
    %343 = vmatpush2.msra.mxu0 0.0
    %344 = vmatprep.subr.mxu0 0.0
    %345 = vmatpush2.msra.mxu0 0.0
    %346 = vmatprep.subr.mxu0 0.0
    %347 = vmatpush2.msra.mxu0 0.0
    %348 = vmatprep.subr.mxu0 0.0
    %349 = vmatpush2.msra.mxu0 0.0
    %350 = vmatprep.subr.mxu0 0.0
    %351 = vmatpush2.msra.mxu0 0.0
    %352 = vmatprep.mubr.f32.mxu0 0.0
    %353 = vmatmul.mubr.f32.gmra.mxu0 %v73
    %v354 = vpop.f32.mrf.mxu0
    %v355 = vadd.f32 0.0, %v354
    %v356 = vpop.f32.mrf.mxu0
    %v357 = vadd.f32 0.0, %v356
    %358 = vdwg.mxu0
    %359 = vmatprep.subr.mxu0 0.0
    %360 = vmatpush1.msra.mxu0 0.0
    %361 = vmatprep.subr.mxu0 0.0
    %362 = vmatpush1.msra.mxu0 0.0
    %363 = vmatprep.subr.mxu0 0.0
    %364 = vmatpush1.msra.mxu0 0.0
    %365 = vmatprep.subr.mxu0 0.0
    %366 = vmatpush1.msra.mxu0 0.0
    %367 = vmatprep.subr.mxu0 0.0
    %368 = vmatpush1.msra.mxu0 0.0
    %369 = vmatprep.subr.mxu0 0.0
    %370 = vmatpush1.msra.mxu0 0.0
    %371 = vmatprep.subr.mxu0 0.0
    %372 = vmatpush1.msra.mxu0 0.0
    %373 = vmatprep.subr.mxu0 0.0
    %374 = vmatpush1.msra.mxu0 0.0
    %375 = vmatprep.subr.mxu0 0.0
    %376 = vmatpush1.msra.mxu0 0.0
    %377 = vmatprep.subr.mxu0 0.0
    %378 = vmatpush1.msra.mxu0 0.0
    %379 = vmatprep.subr.mxu0 0.0
    %380 = vmatpush1.msra.mxu0 0.0
    %381 = vmatprep.subr.mxu0 0.0
    %382 = vmatpush1.msra.mxu0 0.0
    %383 = vmatprep.subr.mxu0 0.0
    %384 = vmatpush1.msra.mxu0 0.0
    %385 = vmatprep.subr.mxu0 0.0
    %386 = vmatpush1.msra.mxu0 0.0
    %387 = vmatprep.subr.mxu0 %v71
    %388 = vmatpush1.msra.mxu0 %v70
    %389 = vmatprep.subr.mxu0 %v61
    %390 = vmatpush1.msra.mxu0 %v60
    %391 = vmatprep.subr.mxu0 0.0
    %392 = vmatpush2.msra.mxu0 0.0
    %393 = vmatprep.subr.mxu0 0.0
    %394 = vmatpush2.msra.mxu0 0.0
    %395 = vmatprep.subr.mxu0 0.0
    %396 = vmatpush2.msra.mxu0 0.0
    %397 = vmatprep.subr.mxu0 0.0
    %398 = vmatpush2.msra.mxu0 0.0
    %399 = vmatprep.subr.mxu0 0.0
    %400 = vmatpush2.msra.mxu0 0.0
    %401 = vmatprep.subr.mxu0 0.0
    %402 = vmatpush2.msra.mxu0 0.0
    %403 = vmatprep.subr.mxu0 0.0
    %404 = vmatpush2.msra.mxu0 0.0
    %405 = vmatprep.subr.mxu0 0.0
    %406 = vmatpush2.msra.mxu0 0.0
    %407 = vmatprep.subr.mxu0 0.0
    %408 = vmatpush2.msra.mxu0 0.0
    %409 = vmatprep.subr.mxu0 0.0
    %410 = vmatpush2.msra.mxu0 0.0
    %411 = vmatprep.subr.mxu0 0.0
    %412 = vmatpush2.msra.mxu0 0.0
    %413 = vmatprep.subr.mxu0 0.0
    %414 = vmatpush2.msra.mxu0 0.0
    %415 = vmatprep.subr.mxu0 0.0
    %416 = vmatpush2.msra.mxu0 0.0
    %417 = vmatprep.subr.mxu0 0.0
    %418 = vmatpush2.msra.mxu0 0.0
    %419 = vmatprep.subr.mxu0 0.0
    %420 = vmatpush2.msra.mxu0 0.0
    %421 = vmatprep.subr.mxu0 0.0
    %422 = vmatpush2.msra.mxu0 0.0
    %423 = vmatprep.mubr.f32.mxu0 0.0
    %424 = vmatmul.mubr.f32.gmra.mxu0 %v73
    %v425 = vpop.f32.mrf.mxu0
    %v426 = vadd.f32 0.0, %v425
    %v427 = vpop.f32.mrf.mxu0
    %v428 = vadd.f32 0.0, %v427
    %429 = vdwg.mxu0
    %430 = vst [vmem:[#allocation7] sm:$0xff] %v142
    %431 = vst [vmem:[#allocation7 + $0x8] sm:$0xff] %v144
    %432 = vst [vmem:[#allocation7 + $0x10] sm:$0xff] %v213
    %433 = vst [vmem:[#allocation7 + $0x18] sm:$0xff] %v215
    %434 = vst [vmem:[#allocation7 + $0x20] sm:$0xff] %v284
    %435 = vst [vmem:[#allocation7 + $0x28] sm:$0xff] %v286
    %436 = vst [vmem:[#allocation7 + $0x30] sm:$0xff] %v355
    %437 = vst [vmem:[#allocation7 + $0x38] sm:$0xff] %v357
    %438 = vst [vmem:[#allocation7 + $0x40] sm:$0xff] %v426
    %439 = vst [vmem:[#allocation7 + $0x48] sm:$0xff] %v428
    %s440 = scalar_lea.vmem [#allocation5], 160
    %v441 = vld [vmem:[%s440] sm:$0xff]
    %v442 = vld [vmem:[%s440 + $0x8] sm:$0xff]
    %v443 = vld [vmem:[%s440 + $0x10] sm:$0xff]
    %v444 = vld [vmem:[%s440 + $0x18] sm:$0xff]
    %v445 = vld [vmem:[%s440 + $0x20] sm:$0xff]
    %v446 = vld [vmem:[%s440 + $0x28] sm:$0xff]
    %v447 = vld [vmem:[%s440 + $0x30] sm:$0xff]
    %v448 = vld [vmem:[%s440 + $0x38] sm:$0xff]
    %v449 = vld [vmem:[%s440 + $0x40] sm:$0xff]
    %v450 = vld [vmem:[%s440 + $0x48] sm:$0xff]
    %v451 = vld [vmem:[%s440 + $0x50] sm:$0xff]
    %v452 = vld [vmem:[%s440 + $0x58] sm:$0xff]
    %v453 = vld [vmem:[%s440 + $0x60] sm:$0xff]
    %v454 = vld [vmem:[%s440 + $0x68] sm:$0xff]
    %v455 = vld [vmem:[%s440 + $0x70] sm:$0xff]
    %v456 = vld [vmem:[%s440 + $0x78] sm:$0xff]
    %v457 = vld [vmem:[%s440 + $0x80] sm:$0xff]
    %v458 = vld [vmem:[%s440 + $0x88] sm:$0xff]
    %v459 = vld [vmem:[%s440 + $0x90] sm:$0xff]
    %v460 = vld [vmem:[%s440 + $0x98] sm:$0xff]
    %461 = vmatprep.subr.mxu0 0.0
    %462 = vmatpush1.msra.mxu0 0.0
    %463 = vmatprep.subr.mxu0 0.0
    %464 = vmatpush1.msra.mxu0 0.0
    %465 = vmatprep.subr.mxu0 0.0
    %466 = vmatpush1.msra.mxu0 0.0
    %467 = vmatprep.subr.mxu0 0.0
    %468 = vmatpush1.msra.mxu0 0.0
    %469 = vmatprep.subr.mxu0 0.0
    %470 = vmatpush1.msra.mxu0 0.0
    %471 = vmatprep.subr.mxu0 0.0
    %472 = vmatpush1.msra.mxu0 0.0
    %473 = vmatprep.subr.mxu0 0.0
    %474 = vmatpush1.msra.mxu0 0.0
    %475 = vmatprep.subr.mxu0 0.0
    %476 = vmatpush1.msra.mxu0 0.0
    %477 = vmatprep.subr.mxu0 0.0
    %478 = vmatpush1.msra.mxu0 0.0
    %479 = vmatprep.subr.mxu0 0.0
    %480 = vmatpush1.msra.mxu0 0.0
    %481 = vmatprep.subr.mxu0 0.0
    %482 = vmatpush1.msra.mxu0 0.0
    %483 = vmatprep.subr.mxu0 0.0
    %484 = vmatpush1.msra.mxu0 0.0
    %485 = vmatprep.subr.mxu0 0.0
    %486 = vmatpush1.msra.mxu0 0.0
    %487 = vmatprep.subr.mxu0 0.0
    %488 = vmatpush1.msra.mxu0 0.0
    %489 = vmatprep.subr.mxu0 %v452
    %490 = vmatpush1.msra.mxu0 %v451
    %491 = vmatprep.subr.mxu0 %v442
    %492 = vmatpush1.msra.mxu0 %v441
    %493 = vmatprep.subr.mxu0 0.0
    %494 = vmatpush2.msra.mxu0 0.0
    %495 = vmatprep.subr.mxu0 0.0
    %496 = vmatpush2.msra.mxu0 0.0
    %497 = vmatprep.subr.mxu0 0.0
    %498 = vmatpush2.msra.mxu0 0.0
    %499 = vmatprep.subr.mxu0 0.0
    %500 = vmatpush2.msra.mxu0 0.0
    %501 = vmatprep.subr.mxu0 0.0
    %502 = vmatpush2.msra.mxu0 0.0
    %503 = vmatprep.subr.mxu0 0.0
    %504 = vmatpush2.msra.mxu0 0.0
    %505 = vmatprep.subr.mxu0 0.0
    %506 = vmatpush2.msra.mxu0 0.0
    %507 = vmatprep.subr.mxu0 0.0
    %508 = vmatpush2.msra.mxu0 0.0
    %509 = vmatprep.subr.mxu0 0.0
    %510 = vmatpush2.msra.mxu0 0.0
    %511 = vmatprep.subr.mxu0 0.0
    %512 = vmatpush2.msra.mxu0 0.0
    %513 = vmatprep.subr.mxu0 0.0
    %514 = vmatpush2.msra.mxu0 0.0
    %515 = vmatprep.subr.mxu0 0.0
    %516 = vmatpush2.msra.mxu0 0.0
    %517 = vmatprep.subr.mxu0 0.0
    %518 = vmatpush2.msra.mxu0 0.0
    %519 = vmatprep.subr.mxu0 0.0
    %520 = vmatpush2.msra.mxu0 0.0
    %521 = vmatprep.subr.mxu0 0.0
    %522 = vmatpush2.msra.mxu0 0.0
    %523 = vmatprep.subr.mxu0 0.0
    %524 = vmatpush2.msra.mxu0 0.0
    %525 = vmatprep.mubr.f32.mxu0 0.0
    %526 = vmatmul.mubr.f32.gmra.mxu0 %v73
    %v527 = vpop.f32.mrf.mxu0
    %v528 = vadd.f32 0.0, %v527
    %v529 = vpop.f32.mrf.mxu0
    %v530 = vadd.f32 0.0, %v529
    %531 = vdwg.mxu0
    %532 = vmatprep.subr.mxu0 0.0
    %533 = vmatpush1.msra.mxu0 0.0
    %534 = vmatprep.subr.mxu0 0.0
    %535 = vmatpush1.msra.mxu0 0.0
    %536 = vmatprep.subr.mxu0 0.0
    %537 = vmatpush1.msra.mxu0 0.0
    %538 = vmatprep.subr.mxu0 0.0
    %539 = vmatpush1.msra.mxu0 0.0
    %540 = vmatprep.subr.mxu0 0.0
    %541 = vmatpush1.msra.mxu0 0.0
    %542 = vmatprep.subr.mxu0 0.0
    %543 = vmatpush1.msra.mxu0 0.0
    %544 = vmatprep.subr.mxu0 0.0
    %545 = vmatpush1.msra.mxu0 0.0
    %546 = vmatprep.subr.mxu0 0.0
    %547 = vmatpush1.msra.mxu0 0.0
    %548 = vmatprep.subr.mxu0 0.0
    %549 = vmatpush1.msra.mxu0 0.0
    %550 = vmatprep.subr.mxu0 0.0
    %551 = vmatpush1.msra.mxu0 0.0
    %552 = vmatprep.subr.mxu0 0.0
    %553 = vmatpush1.msra.mxu0 0.0
    %554 = vmatprep.subr.mxu0 0.0
    %555 = vmatpush1.msra.mxu0 0.0
    %556 = vmatprep.subr.mxu0 0.0
    %557 = vmatpush1.msra.mxu0 0.0
    %558 = vmatprep.subr.mxu0 0.0
    %559 = vmatpush1.msra.mxu0 0.0
    %560 = vmatprep.subr.mxu0 %v454
    %561 = vmatpush1.msra.mxu0 %v453
    %562 = vmatprep.subr.mxu0 %v444
    %563 = vmatpush1.msra.mxu0 %v443
    %564 = vmatprep.subr.mxu0 0.0
    %565 = vmatpush2.msra.mxu0 0.0
    %566 = vmatprep.subr.mxu0 0.0
    %567 = vmatpush2.msra.mxu0 0.0
    %568 = vmatprep.subr.mxu0 0.0
    %569 = vmatpush2.msra.mxu0 0.0
    %570 = vmatprep.subr.mxu0 0.0
    %571 = vmatpush2.msra.mxu0 0.0
    %572 = vmatprep.subr.mxu0 0.0
    %573 = vmatpush2.msra.mxu0 0.0
    %574 = vmatprep.subr.mxu0 0.0
    %575 = vmatpush2.msra.mxu0 0.0
    %576 = vmatprep.subr.mxu0 0.0
    %577 = vmatpush2.msra.mxu0 0.0
    %578 = vmatprep.subr.mxu0 0.0
    %579 = vmatpush2.msra.mxu0 0.0
    %580 = vmatprep.subr.mxu0 0.0
    %581 = vmatpush2.msra.mxu0 0.0
    %582 = vmatprep.subr.mxu0 0.0
    %583 = vmatpush2.msra.mxu0 0.0
    %584 = vmatprep.subr.mxu0 0.0
    %585 = vmatpush2.msra.mxu0 0.0
    %586 = vmatprep.subr.mxu0 0.0
    %587 = vmatpush2.msra.mxu0 0.0
    %588 = vmatprep.subr.mxu0 0.0
    %589 = vmatpush2.msra.mxu0 0.0
    %590 = vmatprep.subr.mxu0 0.0
    %591 = vmatpush2.msra.mxu0 0.0
    %592 = vmatprep.subr.mxu0 0.0
    %593 = vmatpush2.msra.mxu0 0.0
    %594 = vmatprep.subr.mxu0 0.0
    %595 = vmatpush2.msra.mxu0 0.0
    %596 = vmatprep.mubr.f32.mxu0 0.0
    %597 = vmatmul.mubr.f32.gmra.mxu0 %v73
    %v598 = vpop.f32.mrf.mxu0
    %v599 = vadd.f32 0.0, %v598
    %v600 = vpop.f32.mrf.mxu0
    %v601 = vadd.f32 0.0, %v600
    %602 = vdwg.mxu0
    %603 = vmatprep.subr.mxu0 0.0
    %604 = vmatpush1.msra.mxu0 0.0
    %605 = vmatprep.subr.mxu0 0.0
    %606 = vmatpush1.msra.mxu0 0.0
    %607 = vmatprep.subr.mxu0 0.0
    %608 = vmatpush1.msra.mxu0 0.0
    %609 = vmatprep.subr.mxu0 0.0
    %610 = vmatpush1.msra.mxu0 0.0
    %611 = vmatprep.subr.mxu0 0.0
    %612 = vmatpush1.msra.mxu0 0.0
    %613 = vmatprep.subr.mxu0 0.0
    %614 = vmatpush1.msra.mxu0 0.0
    %615 = vmatprep.subr.mxu0 0.0
    %616 = vmatpush1.msra.mxu0 0.0
    %617 = vmatprep.subr.mxu0 0.0
    %618 = vmatpush1.msra.mxu0 0.0
    %619 = vmatprep.subr.mxu0 0.0
    %620 = vmatpush1.msra.mxu0 0.0
    %621 = vmatprep.subr.mxu0 0.0
    %622 = vmatpush1.msra.mxu0 0.0
    %623 = vmatprep.subr.mxu0 0.0
    %624 = vmatpush1.msra.mxu0 0.0
    %625 = vmatprep.subr.mxu0 0.0
    %626 = vmatpush1.msra.mxu0 0.0
    %627 = vmatprep.subr.mxu0 0.0
    %628 = vmatpush1.msra.mxu0 0.0
    %629 = vmatprep.subr.mxu0 0.0
    %630 = vmatpush1.msra.mxu0 0.0
    %631 = vmatprep.subr.mxu0 %v456
    %632 = vmatpush1.msra.mxu0 %v455
    %633 = vmatprep.subr.mxu0 %v446
    %634 = vmatpush1.msra.mxu0 %v445
    %635 = vmatprep.subr.mxu0 0.0
    %636 = vmatpush2.msra.mxu0 0.0
    %637 = vmatprep.subr.mxu0 0.0
    %638 = vmatpush2.msra.mxu0 0.0
    %639 = vmatprep.subr.mxu0 0.0
    %640 = vmatpush2.msra.mxu0 0.0
    %641 = vmatprep.subr.mxu0 0.0
    %642 = vmatpush2.msra.mxu0 0.0
    %643 = vmatprep.subr.mxu0 0.0
    %644 = vmatpush2.msra.mxu0 0.0
    %645 = vmatprep.subr.mxu0 0.0
    %646 = vmatpush2.msra.mxu0 0.0
    %647 = vmatprep.subr.mxu0 0.0
    %648 = vmatpush2.msra.mxu0 0.0
    %649 = vmatprep.subr.mxu0 0.0
    %650 = vmatpush2.msra.mxu0 0.0
    %651 = vmatprep.subr.mxu0 0.0
    %652 = vmatpush2.msra.mxu0 0.0
    %653 = vmatprep.subr.mxu0 0.0
    %654 = vmatpush2.msra.mxu0 0.0
    %655 = vmatprep.subr.mxu0 0.0
    %656 = vmatpush2.msra.mxu0 0.0
    %657 = vmatprep.subr.mxu0 0.0
    %658 = vmatpush2.msra.mxu0 0.0
    %659 = vmatprep.subr.mxu0 0.0
    %660 = vmatpush2.msra.mxu0 0.0
    %661 = vmatprep.subr.mxu0 0.0
    %662 = vmatpush2.msra.mxu0 0.0
    %663 = vmatprep.subr.mxu0 0.0
    %664 = vmatpush2.msra.mxu0 0.0
    %665 = vmatprep.subr.mxu0 0.0
    %666 = vmatpush2.msra.mxu0 0.0
    %667 = vmatprep.mubr.f32.mxu0 0.0
    %668 = vmatmul.mubr.f32.gmra.mxu0 %v73
    %v669 = vpop.f32.mrf.mxu0
    %v670 = vadd.f32 0.0, %v669
    %v671 = vpop.f32.mrf.mxu0
    %v672 = vadd.f32 0.0, %v671
    %673 = vdwg.mxu0
    %674 = vmatprep.subr.mxu0 0.0
    %675 = vmatpush1.msra.mxu0 0.0
    %676 = vmatprep.subr.mxu0 0.0
    %677 = vmatpush1.msra.mxu0 0.0
    %678 = vmatprep.subr.mxu0 0.0
    %679 = vmatpush1.msra.mxu0 0.0
    %680 = vmatprep.subr.mxu0 0.0
    %681 = vmatpush1.msra.mxu0 0.0
    %682 = vmatprep.subr.mxu0 0.0
    %683 = vmatpush1.msra.mxu0 0.0
    %684 = vmatprep.subr.mxu0 0.0
    %685 = vmatpush1.msra.mxu0 0.0
    %686 = vmatprep.subr.mxu0 0.0
    %687 = vmatpush1.msra.mxu0 0.0
    %688 = vmatprep.subr.mxu0 0.0
    %689 = vmatpush1.msra.mxu0 0.0
    %690 = vmatprep.subr.mxu0 0.0
    %691 = vmatpush1.msra.mxu0 0.0
    %692 = vmatprep.subr.mxu0 0.0
    %693 = vmatpush1.msra.mxu0 0.0
    %694 = vmatprep.subr.mxu0 0.0
    %695 = vmatpush1.msra.mxu0 0.0
    %696 = vmatprep.subr.mxu0 0.0
    %697 = vmatpush1.msra.mxu0 0.0
    %698 = vmatprep.subr.mxu0 0.0
    %699 = vmatpush1.msra.mxu0 0.0
    %700 = vmatprep.subr.mxu0 0.0
    %701 = vmatpush1.msra.mxu0 0.0
    %702 = vmatprep.subr.mxu0 %v458
    %703 = vmatpush1.msra.mxu0 %v457
    %704 = vmatprep.subr.mxu0 %v448
    %705 = vmatpush1.msra.mxu0 %v447
    %706 = vmatprep.subr.mxu0 0.0
    %707 = vmatpush2.msra.mxu0 0.0
    %708 = vmatprep.subr.mxu0 0.0
    %709 = vmatpush2.msra.mxu0 0.0
    %710 = vmatprep.subr.mxu0 0.0
    %711 = vmatpush2.msra.mxu0 0.0
    %712 = vmatprep.subr.mxu0 0.0
    %713 = vmatpush2.msra.mxu0 0.0
    %714 = vmatprep.subr.mxu0 0.0
    %715 = vmatpush2.msra.mxu0 0.0
    %716 = vmatprep.subr.mxu0 0.0
    %717 = vmatpush2.msra.mxu0 0.0
    %718 = vmatprep.subr.mxu0 0.0
    %719 = vmatpush2.msra.mxu0 0.0
    %720 = vmatprep.subr.mxu0 0.0
    %721 = vmatpush2.msra.mxu0 0.0
    %722 = vmatprep.subr.mxu0 0.0
    %723 = vmatpush2.msra.mxu0 0.0
    %724 = vmatprep.subr.mxu0 0.0
    %725 = vmatpush2.msra.mxu0 0.0
    %726 = vmatprep.subr.mxu0 0.0
    %727 = vmatpush2.msra.mxu0 0.0
    %728 = vmatprep.subr.mxu0 0.0
    %729 = vmatpush2.msra.mxu0 0.0
    %730 = vmatprep.subr.mxu0 0.0
    %731 = vmatpush2.msra.mxu0 0.0
    %732 = vmatprep.subr.mxu0 0.0
    %733 = vmatpush2.msra.mxu0 0.0
    %734 = vmatprep.subr.mxu0 0.0
    %735 = vmatpush2.msra.mxu0 0.0
    %736 = vmatprep.subr.mxu0 0.0
    %737 = vmatpush2.msra.mxu0 0.0
    %738 = vmatprep.mubr.f32.mxu0 0.0
    %739 = vmatmul.mubr.f32.gmra.mxu0 %v73
    %v740 = vpop.f32.mrf.mxu0
    %v741 = vadd.f32 0.0, %v740
    %v742 = vpop.f32.mrf.mxu0
    %v743 = vadd.f32 0.0, %v742
    %744 = vdwg.mxu0
    %745 = vmatprep.subr.mxu0 0.0
    %746 = vmatpush1.msra.mxu0 0.0
    %747 = vmatprep.subr.mxu0 0.0
    %748 = vmatpush1.msra.mxu0 0.0
    %749 = vmatprep.subr.mxu0 0.0
    %750 = vmatpush1.msra.mxu0 0.0
    %751 = vmatprep.subr.mxu0 0.0
    %752 = vmatpush1.msra.mxu0 0.0
    %753 = vmatprep.subr.mxu0 0.0
    %754 = vmatpush1.msra.mxu0 0.0
    %755 = vmatprep.subr.mxu0 0.0
    %756 = vmatpush1.msra.mxu0 0.0
    %757 = vmatprep.subr.mxu0 0.0
    %758 = vmatpush1.msra.mxu0 0.0
    %759 = vmatprep.subr.mxu0 0.0
    %760 = vmatpush1.msra.mxu0 0.0
    %761 = vmatprep.subr.mxu0 0.0
    %762 = vmatpush1.msra.mxu0 0.0
    %763 = vmatprep.subr.mxu0 0.0
    %764 = vmatpush1.msra.mxu0 0.0
    %765 = vmatprep.subr.mxu0 0.0
    %766 = vmatpush1.msra.mxu0 0.0
    %767 = vmatprep.subr.mxu0 0.0
    %768 = vmatpush1.msra.mxu0 0.0
    %769 = vmatprep.subr.mxu0 0.0
    %770 = vmatpush1.msra.mxu0 0.0
    %771 = vmatprep.subr.mxu0 0.0
    %772 = vmatpush1.msra.mxu0 0.0
    %773 = vmatprep.subr.mxu0 %v460
    %774 = vmatpush1.msra.mxu0 %v459
    %775 = vmatprep.subr.mxu0 %v450
    %776 = vmatpush1.msra.mxu0 %v449
    %777 = vmatprep.subr.mxu0 0.0
    %778 = vmatpush2.msra.mxu0 0.0
    %779 = vmatprep.subr.mxu0 0.0
    %780 = vmatpush2.msra.mxu0 0.0
    %781 = vmatprep.subr.mxu0 0.0
    %782 = vmatpush2.msra.mxu0 0.0
    %783 = vmatprep.subr.mxu0 0.0
    %784 = vmatpush2.msra.mxu0 0.0
    %785 = vmatprep.subr.mxu0 0.0
    %786 = vmatpush2.msra.mxu0 0.0
    %787 = vmatprep.subr.mxu0 0.0
    %788 = vmatpush2.msra.mxu0 0.0
    %789 = vmatprep.subr.mxu0 0.0
    %790 = vmatpush2.msra.mxu0 0.0
    %791 = vmatprep.subr.mxu0 0.0
    %792 = vmatpush2.msra.mxu0 0.0
    %793 = vmatprep.subr.mxu0 0.0
    %794 = vmatpush2.msra.mxu0 0.0
    %795 = vmatprep.subr.mxu0 0.0
    %796 = vmatpush2.msra.mxu0 0.0
    %797 = vmatprep.subr.mxu0 0.0
    %798 = vmatpush2.msra.mxu0 0.0
    %799 = vmatprep.subr.mxu0 0.0
    %800 = vmatpush2.msra.mxu0 0.0
    %801 = vmatprep.subr.mxu0 0.0
    %802 = vmatpush2.msra.mxu0 0.0
    %803 = vmatprep.subr.mxu0 0.0
    %804 = vmatpush2.msra.mxu0 0.0
    %805 = vmatprep.subr.mxu0 0.0
    %806 = vmatpush2.msra.mxu0 0.0
    %807 = vmatprep.subr.mxu0 0.0
    %808 = vmatpush2.msra.mxu0 0.0
    %809 = vmatprep.mubr.f32.mxu0 0.0
    %810 = vmatmul.mubr.f32.gmra.mxu0 %v73
    %v811 = vpop.f32.mrf.mxu0
    %v812 = vadd.f32 0.0, %v811
    %v813 = vpop.f32.mrf.mxu0
    %v814 = vadd.f32 0.0, %v813
    %815 = vdwg.mxu0
    %s816 = scalar_lea.vmem [#allocation7], 80
    %817 = vst [vmem:[%s816] sm:$0xff] %v528
    %818 = vst [vmem:[%s816 + $0x8] sm:$0xff] %v530
    %819 = vst [vmem:[%s816 + $0x10] sm:$0xff] %v599
    %820 = vst [vmem:[%s816 + $0x18] sm:$0xff] %v601
    %821 = vst [vmem:[%s816 + $0x20] sm:$0xff] %v670
    %822 = vst [vmem:[%s816 + $0x28] sm:$0xff] %v672
    %823 = vst [vmem:[%s816 + $0x30] sm:$0xff] %v741
    %824 = vst [vmem:[%s816 + $0x38] sm:$0xff] %v743
    %825 = vst [vmem:[%s816 + $0x40] sm:$0xff] %v812
    %826 = vst [vmem:[%s816 + $0x48] sm:$0xff] %v814
    // Predicated region
    $region18: #{tpu_custom_call.1} parent=1 // pred_check
      _
    $region19: #{tpu_custom_call.1} parent=1 // pred_check_branch
      %828 = sbr.rel (0) target = $region21
    $region20: #{tpu_custom_call.1} parent=1 // pred_region
      %s830 = ssub.s32 2560, 2560
      %831 = vsyncadd [#allocation4], %s830
      %s832 = sshll.u32 [#allocation7], 4
      %s833 = int_to_ptr.vmem [resolvable:$true] %s832
      %838 = dma.vmem_to_hbm [thread:$0]  %s833, 2560, %s2, [#allocation4], 1280, 1280, 80
    $region21: #{tpu_custom_call.1} parent=1 // pred_fallthru
      _
    // Predicated region
    $region22: #{tpu_custom_call.1} parent=1 // pred_check
      _
    $region23: #{tpu_custom_call.1} parent=1 // pred_check_branch
      %840 = sbr.rel (0) target = $region25
    $region24: #{tpu_custom_call.1} parent=1 // pred_region
      %841 = dma.done [#allocation4], 2560
    $region25: #{tpu_custom_call.1} parent=1 // pred_fallthru
      _
    %842 = vsyncpa [#allocation3], 1
    %843 = vsyncpa [#allocation6], 1
    %844 = vsyncpa [#allocation4], 1

</llo_original>
